<compile_context>
chip_gen: v7x
topology: tpu7x:2x2x1
jax: 0.10.0
libtpu: 0.0.40
codegen_flags: <defaults>
</compile_context>

<pallas_src>
import functools

import jax
import jax.numpy as jnp
from jax import lax
from jax.experimental import pallas as pl
from jax.experimental.pallas import tpu as pltpu


# ----------------------------------------------------------------------------- kernel
def _squared_error_kernel(x_ref, t_ref, o_ref, *, pad_idx, smooth_rate, mask_pad):
    """Per-tile: smoothed one-hot truth, squared error, per-row sum (pad-masked)."""
    x = x_ref[...].astype(jnp.float32)          # (TN, V) upcast in vregs only
    tgt = t_ref[...]                            # (TN, 1) int32
    tn, v = x.shape

    denom = v - (2 if pad_idx >= 0 else 1)
    fill = smooth_rate / denom
    peak = 1.0 - smooth_rate

    # (1, V) fill row built once per tile: fill everywhere, 0 at the pad column.
    col = lax.broadcasted_iota(jnp.int32, (1, v), 1)
    if pad_idx >= 0:
        fill_row = jnp.where(col == pad_idx, 0.0, fill)
        # Pad-target rows must keep 0 at the pad column (reference zeroes the pad
        # column AFTER the peak scatter), so make their compare never match.
        tgt_cmp = jnp.where(tgt == pad_idx, jnp.int32(-1), tgt)
    else:
        fill_row = jnp.full((1, v), fill, dtype=jnp.float32)
        tgt_cmp = tgt

    # Single (TN, V) compare + select for the peak; fill_row broadcasts over rows.
    truth = jnp.where(col == tgt_cmp, peak, fill_row)
    d = x - truth
    row_loss = jnp.sum(d * d, axis=-1, keepdims=True)      # (TN, 1)

    if mask_pad and pad_idx >= 0:
        # reference zeroes both x and truth on pad rows -> their row loss is exactly 0
        row_loss = jnp.where(tgt == pad_idx, 0.0, row_loss)

    o_ref[...] = row_loss


# ----------------------------------------------------------------------------- tiling
def _pick_tile_n(n, v, itemsize, budget_bytes=32 << 20, cap=2048, target_steps=8):
    """Row tile sized from a VMEM budget that includes in-kernel f32 temporaries.

    Per-row footprint:
      2 * V * itemsize   double-buffered native-dtype input block
      12 * V             f32 temporaries (upcast, truth, diff) Mosaic may back with VMEM
      ~256 B             lane-padded (8,128) tiles for the (tile_n,1) target/output blocks
    The tile is also capped so the grid keeps >= target_steps steps when N allows
    (megacore sharding on v7x + input/compute pipelining).
    """
    per_row = 2 * v * itemsize + 12 * v + 256
    vmem_rows = max(8, budget_bytes // per_row)
    step_rows = max(8, n // target_steps)
    tile = min(cap, vmem_rows, step_rows)
    return max(8, (tile // 8) * 8)


# ---------------------------------------------------------------------------- wrapper
def squared_error_loss(x, target, *, pad_idx=0, label_smoothing=0.1,
                       mask_pad=True, tile_n=None):
    """Micro-reduced SquaredError with label smoothing (default rtg criterion path)."""
    n, v = x.shape
    assert target.shape[0] == n
    assert 0.0 <= label_smoothing <= 1.0

    itemsize = jnp.dtype(x.dtype).itemsize
    if tile_n is None:
        tile_n = _pick_tile_n(n, v, itemsize)
    tile_n = max(8, (tile_n // 8) * 8)

    t2 = target.astype(jnp.int32).reshape(n, 1)

    # Pad N up to a tile multiple (padded rows: x=0, target=pad) instead of falling back
    # to one giant block; padded rows are sliced off before the final sum.
    n_pad = int(pl.cdiv(n, tile_n)) * tile_n
    if n_pad != n:
        pad_rows = n_pad - n
        pad_tgt = pad_idx if pad_idx >= 0 else 0
        x_in = jnp.pad(x, ((0, pad_rows), (0, 0)))
        t_in = jnp.pad(t2, ((0, pad_rows), (0, 0)), constant_values=pad_tgt)
    else:
        x_in, t_in = x, t2

    kernel = functools.partial(
        _squared_error_kernel,
        pad_idx=pad_idx, smooth_rate=float(label_smoothing), mask_pad=mask_pad)

    # VMEM: double-buffered input block + f32 temporaries + lane-padded small blocks.
    in_block = tile_n * v * itemsize
    temp_bytes = tile_n * v * 12
    small_bytes = 4 * ((tile_n + 7) // 8) * 8 * 128 * 4     # tgt + out, 2 buffers each
    vmem_limit = int(max(2 * in_block + temp_bytes + small_bytes + (2 << 20), 16 << 20))

    row_loss = pl.pallas_call(
        kernel,
        out_shape=jax.ShapeDtypeStruct((n_pad, 1), jnp.float32),
        grid_spec=pltpu.PrefetchScalarGridSpec(
            num_scalar_prefetch=0,
            grid=(n_pad // tile_n,),
            in_specs=[
                pl.BlockSpec((tile_n, v), lambda i: (i, 0)),
                pl.BlockSpec((tile_n, 1), lambda i: (i, 0)),
            ],
            out_specs=pl.BlockSpec((tile_n, 1), lambda i: (i, 0)),
        ),
        compiler_params=pltpu.CompilerParams(
            dimension_semantics=("parallel",),
            vmem_limit_bytes=vmem_limit),
    )(x_in, t_in)

    # Tiny final reduction + token count in the wrapper (free in XLA, keeps grid parallel).
    if mask_pad:
        tot = jnp.sum((t2[:, 0] != pad_idx).astype(jnp.float32))
    else:
        tot = jnp.float32(n)
    return jnp.sum(row_loss[:n, 0]) / tot


# -------------------------------------------------------------------------- reference
def _reference(x, target, pad_idx=0, label_smoothing=0.1, mask_pad=True):
    """Pure-JAX mirror of SquaredError.forward (micro reduction, weight=None)."""
    n, v = x.shape
    fill = label_smoothing / (v - (2 if pad_idx >= 0 else 1))
    onehot = jax.nn.one_hot(target, v, dtype=jnp.float32)
    truth = jnp.where(onehot > 0, 1.0 - label_smoothing, fill)
    if pad_idx >= 0:
        truth = truth.at[:, pad_idx].set(0.0)
    xf = x.astype(jnp.float32)
    tot = jnp.float32(n)
    if mask_pad:
        mask = (target == pad_idx)[:, None]
        truth = jnp.where(mask, 0.0, truth)
        xf = jnp.where(mask, 0.0, xf)
        tot = jnp.float32(n) - jnp.sum(mask.astype(jnp.float32))
    dsq = (xf - truth) ** 2
    return jnp.sum(dsq) / tot


if __name__ == "__main__":
    key = jax.random.PRNGKey(0)
    N, V = 16, 32          # 16 tokens (batch=2 x seq=8 flattened), 32 classes
    PAD_IDX = 0
    LS = 0.1

    k_x, k_t = jax.random.split(key)
    x = jax.random.normal(k_x, (N, V), dtype=jnp.float32)
    target = jax.random.randint(k_t, (N,), 1, V, dtype=jnp.int32)
    target = target.at[3].set(PAD_IDX).at[11].set(PAD_IDX)   # exercise pad masking

    ref = _reference(x, target, pad_idx=PAD_IDX, label_smoothing=LS, mask_pad=True)

    # 1) auto tile (tile capped so the grid keeps >= 2 steps -> megacore-friendly)
    loss = jax.block_until_ready(
        squared_error_loss(x, target, pad_idx=PAD_IDX, label_smoothing=LS, mask_pad=True))
    assert jnp.allclose(loss, ref, rtol=1e-5, atol=1e-5), (loss, ref)

    # 2) explicit small tile (multi-step parallel grid)
    loss2 = jax.block_until_ready(
        squared_error_loss(x, target, pad_idx=PAD_IDX, label_smoothing=LS,
                           mask_pad=True, tile_n=8))
    assert jnp.allclose(loss2, ref, rtol=1e-5, atol=1e-5), (loss2, ref)

    # 3) native bf16 inputs (no wrapper-side f32 cast; kernel upcasts in vregs)
    x_bf16 = x.astype(jnp.bfloat16)
    ref3 = _reference(x_bf16, target, pad_idx=PAD_IDX, label_smoothing=LS, mask_pad=True)
    loss3 = jax.block_until_ready(
        squared_error_loss(x_bf16, target, pad_idx=PAD_IDX, label_smoothing=LS,
                           mask_pad=True, tile_n=8))
    assert jnp.allclose(loss3, ref3, rtol=1e-4, atol=1e-4), (loss3, ref3)

    # 4) mask_pad=False with pad-target rows (checks pad-column-after-peak order)
    ref4 = _reference(x, target, pad_idx=PAD_IDX, label_smoothing=LS, mask_pad=False)
    loss4 = jax.block_until_ready(
        squared_error_loss(x, target, pad_idx=PAD_IDX, label_smoothing=LS, mask_pad=False))
    assert jnp.allclose(loss4, ref4, rtol=1e-5, atol=1e-5), (loss4, ref4)

    # 5) N not a multiple of the tile (row-padding path instead of one giant block)
    N2 = 13
    x5, t5 = x[:N2], target[:N2]
    ref5 = _reference(x5, t5, pad_idx=PAD_IDX, label_smoothing=LS, mask_pad=True)
    loss5 = jax.block_until_ready(
        squared_error_loss(x5, t5, pad_idx=PAD_IDX, label_smoothing=LS, mask_pad=True))
    assert jnp.allclose(loss5, ref5, rtol=1e-5, atol=1e-5), (loss5, ref5)

    print("KERNEL_OK")
</pallas_src>

<mosaic_0001>
module attributes {stable_mosaic.version = 11 : i64} {
  func.func @_squared_error_kernel(%arg0: i32, %arg1: memref<8x32xf32, #tpu.memory_space<vmem>>, %arg2: memref<8x1xi32, #tpu.memory_space<vmem>>, %arg3: memref<8x1xf32, #tpu.memory_space<vmem>>) attributes {dimension_semantics = [#tpu.dimension_semantics<parallel>], iteration_bounds = array<i64: 2>, scalar_prefetch = 0 : i64, scratch_operands = 0 : i64, tpu.core_type = #tpu.core_type<tc>, window_params = [{transform_indices = @transform_0, window_bounds = array<i64: 8, 32>}, {transform_indices = @transform_1, window_bounds = array<i64: 8, 1>}, {transform_indices = @transform_2, window_bounds = array<i64: 8, 1>}]} {
    %c0 = arith.constant 0 : index
    %c0_0 = arith.constant 0 : index
    %0 = vector.load %arg1[%c0, %c0_0] : memref<8x32xf32, #tpu.memory_space<vmem>>, vector<8x32xf32>
    %c0_1 = arith.constant 0 : index
    %c0_2 = arith.constant 0 : index
    %1 = vector.load %arg2[%c0_1, %c0_2] : memref<8x1xi32, #tpu.memory_space<vmem>>, vector<8x1xi32>
    %2 = tpu.iota {dimensions = array<i32: 1>} : vector<1x32xi32>
    %c0_i32 = arith.constant 0 : i32
    %3 = vector.broadcast %c0_i32 : i32 to vector<1x32xi32>
    %4 = arith.cmpi eq, %2, %3 : vector<1x32xi32>
    %cst = arith.constant 0.000000e+00 : f32
    %cst_3 = arith.constant 0.00333333341 : f32
    %5 = vector.broadcast %cst : f32 to vector<1x32xf32>
    %6 = vector.broadcast %cst_3 : f32 to vector<1x32xf32>
    %7 = arith.select %4, %5, %6 : vector<1x32xi1>, vector<1x32xf32>
    %c0_i32_4 = arith.constant 0 : i32
    %8 = vector.broadcast %c0_i32_4 : i32 to vector<8x1xi32>
    %9 = arith.cmpi eq, %1, %8 : vector<8x1xi32>
    %c-1_i32 = arith.constant -1 : i32
    %10 = vector.broadcast %c-1_i32 : i32 to vector<8x1xi32>
    %11 = arith.select %9, %10, %1 : vector<8x1xi1>, vector<8x1xi32>
    %12 = vector.broadcast %2 : vector<1x32xi32> to vector<8x32xi32>
    %13 = vector.broadcast %11 : vector<8x1xi32> to vector<8x32xi32>
    %14 = arith.cmpi eq, %12, %13 : vector<8x32xi32>
    %cst_5 = arith.constant 0.899999976 : f32
    %15 = vector.broadcast %cst_5 : f32 to vector<8x32xf32>
    %16 = vector.shape_cast %7 : vector<1x32xf32> to vector<1x32xf32>
    %17 = vector.broadcast %16 : vector<1x32xf32> to vector<8x32xf32>
    %18 = arith.select %14, %15, %17 : vector<8x32xi1>, vector<8x32xf32>
    %19 = arith.subf %0, %18 : vector<8x32xf32>
    %20 = arith.mulf %19, %19 : vector<8x32xf32>
    %cst_6 = arith.constant dense<0.000000e+00> : vector<8xf32>
    %21 = vector.multi_reduction <add>, %20, %cst_6 [1] : vector<8x32xf32> to vector<8xf32>
    %22 = vector.shape_cast %21 : vector<8xf32> to vector<8x1xf32>
    %c0_i32_7 = arith.constant 0 : i32
    %23 = vector.broadcast %c0_i32_7 : i32 to vector<8x1xi32>
    %24 = arith.cmpi eq, %1, %23 : vector<8x1xi32>
    %cst_8 = arith.constant 0.000000e+00 : f32
    %25 = vector.broadcast %cst_8 : f32 to vector<8x1xf32>
    %26 = arith.select %24, %25, %22 : vector<8x1xi1>, vector<8x1xf32>
    %c0_9 = arith.constant 0 : index
    %c0_10 = arith.constant 0 : index
    %27 = vector.load %arg3[%c0_9, %c0_10] : memref<8x1xf32, #tpu.memory_space<vmem>>, vector<8x1xf32>
    tpu.vector_store %arg3[%c0_9, %c0_10], %26 {strides = array<i32>} : memref<8x1xf32, #tpu.memory_space<vmem>>, vector<8x1xf32>,
    return
  }
  func.func @transform_0(%arg0: i32) -> (i32, i32) {
    %c0_i32 = arith.constant 0 : i32
    %c0_i32_0 = arith.constant 0 : i32
    return %arg0, %c0_i32 : i32, i32
  }
  func.func @transform_1(%arg0: i32) -> (i32, i32) {
    %c0_i32 = arith.constant 0 : i32
    %c0_i32_0 = arith.constant 0 : i32
    return %arg0, %c0_i32 : i32, i32
  }
  func.func @transform_2(%arg0: i32) -> (i32, i32) {
    %c0_i32 = arith.constant 0 : i32
    %c0_i32_0 = arith.constant 0 : i32
    return %arg0, %c0_i32 : i32, i32
  }
}

</mosaic_0001>

<llo_original>
// kernel: tpu_custom_call.1
$region0: #{tpu_custom_call.1}
  #allocation0 [shape = 'u32[]', space=smem, size = 0x4, offset = 0x4, fixed_abs, tag = 'smem constant byte address 0x4 - core index']
  #allocation1 [shape = 'u32[144,128]{1,0:T(1,128)}', space=vmem, size = 0x12000, scoped, tag = 'internal scratch']
  %s0 = inlined_call_operand.vmem [shape: f32[16,32], index: 0, kind: input, shape index: {}]
  %s1 = inlined_call_operand.vmem [shape: s32[16,1], index: 1, kind: input, shape index: {}]
  %s2 = inlined_call_operand.vmem [shape: f32[16,1], index: 2, kind: output, shape index: {}]
  %s3 = sld [smem:[#allocation0]]
  $region41: #{tpu_custom_call.1} parent=0
    _
  %s5 = ssub.s32 1, %s3
  %s6 = scalar_select 0, %s5, %s3
  loop: start=0, step=1, limit=4
  $region2: #{tpu_custom_call.1} parent=0 // loop_pre_header
    _
  $region3: #{tpu_custom_call.1} parent=0 // loop_header
    %s8 = sphi 0, %s12
    %p9 = scmp.ge.s32.totalorder %s8, 4
    %s18 = sphi 0, %s20
    %s21 = sphi 0, %s18
    %s22 = sphi 0, %s21
    %s38 = sphi 0, %s22
    %s44 = sphi 0, %s46
    %s47 = sphi 0, %s44
    %s48 = sphi 0, %s47
    %s64 = sphi 0, %s48
    %s70 = sphi 0, %s72
    %s73 = sphi 0, %s70
    %s74 = sphi 0, %s73
    %s90 = sphi 0, %s74
  $region4: #{tpu_custom_call.1} parent=0 // loop_header_branch
    %11 = sbr.rel (%p9) target = $region8
  $region5: #{tpu_custom_call.1} parent=0 // loop_body
    %s13 = ssub.s32 %s8, 1
    %s14 = ssub.s32 %s8, 2
    %s15 = sadd.s32 %s8, 1
    %s16 = ssub.s32 %s8, %s15
    %p17 = scmp.eq.s32.totalorder %s16, 0
    %s19 = sadd.s32 %s18, 1
    %s20 = scalar_select %p17, %s18, %s19
    %p23 = pneg %p17
    %p24 = scmp.eq.s32.totalorder %s8, 1
    %p25 = por %p23, %p24
    %p26 = scmp.ne.s32.totalorder %s18, %s21
    %p27 = scmp.eq.s32.totalorder %s8, 0
    %p28 = por %p26, %p27
    %p29 = scmp.ne.s32.totalorder %s18, %s21
    %p30 = scmp.eq.s32.totalorder %s13, 1
    %p31 = por %p29, %p30
    %p32 = scmp.ne.s32.totalorder %s21, %s22
    %p33 = scmp.eq.s32.totalorder %s13, 0
    %p34 = por %p32, %p33
    %p35 = scmp.ne.s32.totalorder %s21, %s22
    %p36 = scmp.eq.s32.totalorder %s14, 1
    %p37 = por %p35, %p36
    %p39 = scmp.ne.s32.totalorder %s22, %s38
    %p40 = scmp.eq.s32.totalorder %s14, 0
    %p41 = por %p39, %p40
    %s42 = ssub.s32 %s8, %s15
    %p43 = scmp.eq.s32.totalorder %s42, 0
    %s45 = sadd.s32 %s44, 1
    %s46 = scalar_select %p43, %s44, %s45
    %p49 = pneg %p43
    %p50 = scmp.eq.s32.totalorder %s8, 1
    %p51 = por %p49, %p50
    %p52 = scmp.ne.s32.totalorder %s44, %s47
    %p53 = scmp.eq.s32.totalorder %s8, 0
    %p54 = por %p52, %p53
    %p55 = scmp.ne.s32.totalorder %s44, %s47
    %p56 = scmp.eq.s32.totalorder %s13, 1
    %p57 = por %p55, %p56
    %p58 = scmp.ne.s32.totalorder %s47, %s48
    %p59 = scmp.eq.s32.totalorder %s13, 0
    %p60 = por %p58, %p59
    %p61 = scmp.ne.s32.totalorder %s47, %s48
    %p62 = scmp.eq.s32.totalorder %s14, 1
    %p63 = por %p61, %p62
    %p65 = scmp.ne.s32.totalorder %s48, %s64
    %p66 = scmp.eq.s32.totalorder %s14, 0
    %p67 = por %p65, %p66
    %s68 = ssub.s32 %s8, %s15
    %p69 = scmp.eq.s32.totalorder %s68, 0
    %s71 = sadd.s32 %s70, 1
    %s72 = scalar_select %p69, %s70, %s71
    %p75 = pneg %p69
    %p76 = scmp.eq.s32.totalorder %s8, 1
    %p77 = por %p75, %p76
    %p78 = scmp.ne.s32.totalorder %s70, %s73
    %p79 = scmp.eq.s32.totalorder %s8, 0
    %p80 = por %p78, %p79
    %p81 = scmp.ne.s32.totalorder %s70, %s73
    %p82 = scmp.eq.s32.totalorder %s13, 1
    %p83 = por %p81, %p82
    %p84 = scmp.ne.s32.totalorder %s73, %s74
    %p85 = scmp.eq.s32.totalorder %s13, 0
    %p86 = por %p84, %p85
    %p87 = scmp.ne.s32.totalorder %s73, %s74
    %p88 = scmp.eq.s32.totalorder %s14, 1
    %p89 = por %p87, %p88
    %p91 = scmp.ne.s32.totalorder %s74, %s90
    %p92 = scmp.eq.s32.totalorder %s14, 0
    %p93 = por %p91, %p92
    %p94 = scmp.le.s32.totalorder 1, %s8
    %p95 = scmp.lt.s32.totalorder %s8, 3
    %p96 = pnand %p94, %p95
    %p97 = pneg %p96
    // Predicated region
    $region9: #{tpu_custom_call.1} parent=5 // pred_check
      _
    $region10: #{tpu_custom_call.1} parent=5 // pred_check_branch
      %99 = sbr.rel (%p96) target = $region12
    $region11: #{tpu_custom_call.1} parent=5 // pred_region
      %s100 = ssub.s32 %s8, 1
    $region12: #{tpu_custom_call.1} parent=5 // pred_fallthru
      _
    %p101 = scmp.lt.s32.totalorder %s8, 2
    // Predicated region
    $region13: #{tpu_custom_call.1} parent=5 // pred_check
      %p102 = pneg %p101
    $region14: #{tpu_custom_call.1} parent=5 // pred_check_branch
      %104 = sbr.rel (%p102) target = $region16
    $region15: #{tpu_custom_call.1} parent=5 // pred_region
      // Predicated region
      $region17: #{tpu_custom_call.1} parent=15 // pred_check
        %p105 = pneg %p28
      $region18: #{tpu_custom_call.1} parent=15 // pred_check_branch
        %107 = sbr.rel (%p105) target = $region20
      $region19: #{tpu_custom_call.1} parent=15 // pred_region
        %p108 = scmp.lt.s32.totalorder %s8, 1
        %s109 = scalar_select %p108, %s8, 1
        %s110 = smul.addr %s109, 8
        %s111 = scalar_lea.vmem %s0, %s110
      $region20: #{tpu_custom_call.1} parent=15 // pred_fallthru
        _
      // Predicated region
      $region21: #{tpu_custom_call.1} parent=15 // pred_check
        %p112 = pneg %p54
      $region22: #{tpu_custom_call.1} parent=15 // pred_check_branch
        %114 = sbr.rel (%p112) target = $region24
      $region23: #{tpu_custom_call.1} parent=15 // pred_region
        %p115 = scmp.lt.s32.totalorder %s8, 1
        %s116 = scalar_select %p115, %s8, 1
        %s117 = smul.addr %s116, 8
        %s118 = scalar_lea.vmem %s1, %s117
      $region24: #{tpu_custom_call.1} parent=15 // pred_fallthru
        _
    $region16: #{tpu_custom_call.1} parent=5 // pred_fallthru
      _
    %p119 = scmp.le.s32.totalorder 1, %s8
    %p120 = scmp.lt.s32.totalorder %s8, 3
    %p121 = pnand %p119, %p120
    %p122 = pneg %p121
    // Predicated region
    $region25: #{tpu_custom_call.1} parent=5 // pred_check
      _
    $region26: #{tpu_custom_call.1} parent=5 // pred_check_branch
      %124 = sbr.rel (%p121) target = $region28
    $region27: #{tpu_custom_call.1} parent=5 // pred_region
      %s125 = ssub.s32 %s8, 1
      %p126 = scmp.lt.s32.totalorder %s13, 1
      %s127 = scalar_select %p126, %s13, 1
      %s128 = smul.addr %s127, 8
      %s129 = scalar_lea.vmem %s0, %s128
      %p130 = pneg %p34
      %p131 = pneg %p31
      %p132 = scmp.lt.s32.totalorder %s13, 1
      %s133 = scalar_select %p132, %s13, 1
      %s134 = smul.addr %s133, 8
      %s135 = scalar_lea.vmem %s1, %s134
      %p136 = pneg %p60
      %p137 = pneg %p57
      %p138 = pneg %p86
      %p139 = pneg %p83
      %p140 = scmp.lt.s32.totalorder %s13, 1
      %s141 = scalar_select %p140, %s13, 1
      %s142 = smul.addr %s141, 8
      %s143 = scalar_lea.vmem %s2, %s142
      %p144 = scmp.lt.s32.totalorder %s13, 1
      %s145 = scalar_select %p144, %s13, 1
      %s146 = smul.addr %s145, 8
      %s147 = scalar_lea.vmem %s0, %s146
      %p148 = scmp.lt.s32.totalorder %s13, 1
      %s149 = scalar_select %p148, %s13, 1
      %s150 = smul.addr %s149, 8
      %s151 = scalar_lea.vmem %s1, %s150
      %p152 = scmp.lt.s32.totalorder %s13, 1
      %s153 = scalar_select %p152, %s13, 1
      %s154 = smul.addr %s153, 8
      %s155 = scalar_lea.vmem %s2, %s154
      %v156 = vld [vmem:[%s147] sm:$0xff]
      %v157 = vld [vmem:[%s151] sm:$0xff]
      %v158 = vlaneseq
      %v159 = vand.u32 %v158, 127
      %vm160 = vcmp.eq.s32.totalorder %v159, 0
      %v161 = vsel %vm160, 0.0, 0.0033333334
      %vm162 = vcmp.eq.s32.totalorder %v157, 0
      %v163 = vsel %vm162, 4294967295, %v157
      %164 = vset.pattern.permute.xlu0 0
      %165 = vperm.xlu0 %164, %v163
      %v166 = vpop.permute.xlu0 %165
      %vm167 = vcmp.eq.s32.totalorder %v159, %v166
      %v168 = vsel %vm167, 0.9, %v161
      %v169 = vsub.f32 %v156, %v168
      %v170 = vmul.f32 %v169, %v169
      %vm171 = vcmask 261120
      %v172 = vsel %vm171, %v170, 0.0
      %173 = vadd.xlane.f32.xlu0 %v172
      %v174 = vpop.xlane.xlu0 %173
      %v175 = vsel %vm162, 0.0, %v174
      %vm176 = vcmask 7168
      %177 = vst.msk [vmem:[%s155] sm:$0xff] %vm176, %v175
      %p178 = scmp.lt.s32.totalorder %s13, 1
      %s179 = scalar_select %p178, %s13, 1
      %s180 = smul.addr %s179, 8
      %s181 = scalar_lea.vmem %s2, %s180
      // Predicated region
      $region29: #{tpu_custom_call.1} parent=27 // pred_check
        %p182 = pneg %p83
      $region30: #{tpu_custom_call.1} parent=27 // pred_check_branch
        %184 = sbr.rel (%p182) target = $region32
      $region31: #{tpu_custom_call.1} parent=27 // pred_region
        _
      $region32: #{tpu_custom_call.1} parent=27 // pred_fallthru
        _
    $region28: #{tpu_custom_call.1} parent=5 // pred_fallthru
      _
    %p185 = scmp.le.s32.totalorder 2, %s8
    // Predicated region
    $region33: #{tpu_custom_call.1} parent=5 // pred_check
      %p186 = pneg %p185
    $region34: #{tpu_custom_call.1} parent=5 // pred_check_branch
      %188 = sbr.rel (%p186) target = $region36
    $region35: #{tpu_custom_call.1} parent=5 // pred_region
      %s189 = ssub.s32 %s8, 2
      // Predicated region
      $region37: #{tpu_custom_call.1} parent=35 // pred_check
        %p190 = pneg %p89
      $region38: #{tpu_custom_call.1} parent=35 // pred_check_branch
        %192 = sbr.rel (%p190) target = $region40
      $region39: #{tpu_custom_call.1} parent=35 // pred_region
        %p193 = scmp.lt.s32.totalorder %s14, 1
        %s194 = scalar_select %p193, %s14, 1
        %s195 = smul.addr %s194, 8
        %s196 = scalar_lea.vmem %s2, %s195
      $region40: #{tpu_custom_call.1} parent=35 // pred_fallthru
        _
    $region36: #{tpu_custom_call.1} parent=5 // pred_fallthru
      _
  $region6: #{tpu_custom_call.1} parent=0 // loop_footer
    %s12 = sadd.s32 1, %s8
  $region7: #{tpu_custom_call.1} parent=0 // loop_footer_branch
    %7 = sbr.rel target = $region3
  $region8: #{tpu_custom_call.1} parent=0 // loop_exit
    _

</llo_original>
